<compile_context>
chip_gen: v5e
topology: v5e:2x2
jax: 0.10.0
libtpu: 0.0.40
codegen_flags: <defaults>
</compile_context>

<pallas_src>
import jax
import jax.numpy as jnp
from jax.experimental import pallas as pl
from jax.experimental.pallas import tpu as pltpu  # noqa: F401  (kept for TPU-specific tuning hooks)

EPS = 1e-5


def residual_kernel(x_ref, w_ref, gamma_ref, beta_ref, out_ref):
    # Small CTGAN residual layer: all operands fit in a single VMEM block, so the
    # matmul, batch-norm reduction, relu and both output stores live in one kernel.
    x = x_ref[...]                                  # (B, i)
    w = w_ref[...]                                  # (o, i)  PyTorch Linear layout

    # Linear WITHOUT bias (bias cancels exactly under the BN mean subtraction).
    # Contract last dims of both operands -> no in-kernel transpose.
    h = jax.lax.dot_general(
        x, w,
        dimension_numbers=(((1,), (1,)), ((), ())),
        preferred_element_type=jnp.float32,
    )                                               # (B, o) f32 accumulator

    # BatchNorm1d, training mode: biased variance over the batch dimension.
    mean = jnp.mean(h, axis=0, keepdims=True)       # (1, o)
    centered = h - mean
    var = jnp.mean(centered * centered, axis=0, keepdims=True)
    inv_std = jax.lax.rsqrt(var + EPS)
    hn = centered * inv_std * gamma_ref[...] + beta_ref[...]

    o = hn.shape[1]
    # Two direct slice stores instead of a lane-shuffling concatenate.
    out_ref[:, :o] = jnp.maximum(hn, 0.0).astype(out_ref.dtype)
    out_ref[:, o:] = x                              # pure passthrough copy


def residual_forward(x, w, gamma, beta):
    """x: (B, i); w: (o, i) PyTorch layout; gamma/beta: (1, o).  Returns (B, o + i)."""
    B, i = x.shape
    o = w.shape[0]
    return pl.pallas_call(
        residual_kernel,
        out_shape=jax.ShapeDtypeStruct((B, o + i), x.dtype),
    )(x, w, gamma, beta)


def reference_forward(x, w, b, gamma, beta):
    """Pure-JAX reference with the Linear bias applied (matches torch exactly)."""
    h = x.astype(jnp.float32) @ w.astype(jnp.float32).T + b.astype(jnp.float32)
    mean = jnp.mean(h, axis=0, keepdims=True)
    var = jnp.mean((h - mean) ** 2, axis=0, keepdims=True)
    hn = (h - mean) * jax.lax.rsqrt(var + EPS) * gamma + beta
    out = jnp.maximum(hn, 0.0)
    return jnp.concatenate([out, x.astype(jnp.float32)], axis=1).astype(x.dtype)


if __name__ == "__main__":
    # Small shapes consistent with Residual(i, o); i = o = 128 keeps the output
    # lane-dense (multiples of 128) per the perf review.
    B, I, O = 8, 128, 128

    key = jax.random.PRNGKey(0)
    kx, kw, kb = jax.random.split(key, 3)

    x = jax.random.normal(kx, (B, I), dtype=jnp.float32)
    # PyTorch-like small uniform init for Linear, gamma=1 / beta=0 for BatchNorm1d.
    bound = 1.0 / (I ** 0.5)
    w = jax.random.uniform(kw, (O, I), minval=-bound, maxval=bound, dtype=jnp.float32)
    b = jax.random.uniform(kb, (1, O), minval=-bound, maxval=bound, dtype=jnp.float32)
    gamma = jnp.ones((1, O), dtype=jnp.float32)
    beta = jnp.zeros((1, O), dtype=jnp.float32)

    # Kernel omits the bias (exactly cancelled by BN); reference applies it.
    out = residual_forward(x, w, gamma, beta)
    out = jax.block_until_ready(out)

    ref = reference_forward(x, w, b, gamma, beta)
    assert out.shape == (B, O + I), out.shape
    assert jnp.allclose(out, ref, atol=1e-4, rtol=1e-4), "mismatch vs reference"

    print("KERNEL_OK")
</pallas_src>

<mosaic_0001>
module attributes {stable_mosaic.version = 11 : i64} {
  func.func @residual_kernel(%arg0: memref<8x128xf32, #tpu.memory_space<vmem>>, %arg1: memref<128x128xf32, #tpu.memory_space<vmem>>, %arg2: memref<1x128xf32, #tpu.memory_space<vmem>>, %arg3: memref<1x128xf32, #tpu.memory_space<vmem>>, %arg4: memref<8x256xf32, #tpu.memory_space<vmem>>) attributes {dimension_semantics = [], scalar_prefetch = 0 : i64, scratch_operands = 0 : i64, tpu.core_type = #tpu.core_type<tc>} {
    %c0 = arith.constant 0 : index
    %c0_0 = arith.constant 0 : index
    %0 = vector.load %arg0[%c0, %c0_0] : memref<8x128xf32, #tpu.memory_space<vmem>>, vector<8x128xf32>
    %c0_1 = arith.constant 0 : index
    %c0_2 = arith.constant 0 : index
    %1 = vector.load %arg1[%c0_1, %c0_2] : memref<128x128xf32, #tpu.memory_space<vmem>>, vector<128x128xf32>
    %cst = arith.constant dense<0.000000e+00> : vector<8x128xf32>
    %2 = tpu.matmul %0, %1, %cst {dimension_numbers = #tpu.dot_dimension_numbers<[1], [1], [0], [0], [0, 0, 1, 0], [], []>} : vector<8x128xf32>, vector<128x128xf32>, vector<8x128xf32> -> vector<8x128xf32>
    %cst_3 = arith.constant dense<0.000000e+00> : vector<128xf32>
    %3 = vector.multi_reduction <add>, %2, %cst_3 [0] : vector<8x128xf32> to vector<128xf32>
    %4 = vector.shape_cast %3 : vector<128xf32> to vector<1x128xf32>
    %cst_4 = arith.constant 8.000000e+00 : f32
    %5 = vector.broadcast %cst_4 : f32 to vector<1x128xf32>
    %6 = arith.divf %4, %5 : vector<1x128xf32>
    %7 = vector.broadcast %6 : vector<1x128xf32> to vector<8x128xf32>
    %8 = arith.subf %2, %7 : vector<8x128xf32>
    %9 = arith.mulf %8, %8 : vector<8x128xf32>
    %cst_5 = arith.constant dense<0.000000e+00> : vector<128xf32>
    %10 = vector.multi_reduction <add>, %9, %cst_5 [0] : vector<8x128xf32> to vector<128xf32>
    %11 = vector.shape_cast %10 : vector<128xf32> to vector<1x128xf32>
    %cst_6 = arith.constant 8.000000e+00 : f32
    %12 = vector.broadcast %cst_6 : f32 to vector<1x128xf32>
    %13 = arith.divf %11, %12 : vector<1x128xf32>
    %cst_7 = arith.constant 9.99999974E-6 : f32
    %14 = vector.broadcast %cst_7 : f32 to vector<1x128xf32>
    %15 = arith.addf %13, %14 : vector<1x128xf32>
    %16 = math.rsqrt %15 : vector<1x128xf32>
    %17 = vector.broadcast %16 : vector<1x128xf32> to vector<8x128xf32>
    %18 = arith.mulf %8, %17 : vector<8x128xf32>
    %c0_8 = arith.constant 0 : index
    %c0_9 = arith.constant 0 : index
    %19 = vector.load %arg2[%c0_8, %c0_9] : memref<1x128xf32, #tpu.memory_space<vmem>>, vector<1x128xf32>
    %20 = vector.broadcast %19 : vector<1x128xf32> to vector<8x128xf32>
    %21 = arith.mulf %18, %20 : vector<8x128xf32>
    %c0_10 = arith.constant 0 : index
    %c0_11 = arith.constant 0 : index
    %22 = vector.load %arg3[%c0_10, %c0_11] : memref<1x128xf32, #tpu.memory_space<vmem>>, vector<1x128xf32>
    %23 = vector.broadcast %22 : vector<1x128xf32> to vector<8x128xf32>
    %24 = arith.addf %21, %23 : vector<8x128xf32>
    %cst_12 = arith.constant 0.000000e+00 : f32
    %25 = vector.broadcast %cst_12 : f32 to vector<8x128xf32>
    %26 = arith.maximumf %24, %25 : vector<8x128xf32>
    %c0_13 = arith.constant 0 : index
    %c0_14 = arith.constant 0 : index
    %27 = vector.load %arg4[%c0_13, %c0_14] : memref<8x256xf32, #tpu.memory_space<vmem>>, vector<8x128xf32>
    tpu.vector_store %arg4[%c0_13, %c0_14], %26 {strides = array<i32>} : memref<8x256xf32, #tpu.memory_space<vmem>>, vector<8x128xf32>,
    %c0_15 = arith.constant 0 : index
    %c128 = arith.constant 128 : index
    %28 = vector.load %arg4[%c0_15, %c128] : memref<8x256xf32, #tpu.memory_space<vmem>>, vector<8x128xf32>
    tpu.vector_store %arg4[%c0_15, %c128], %0 {strides = array<i32>} : memref<8x256xf32, #tpu.memory_space<vmem>>, vector<8x128xf32>,
    return
  }
}

</mosaic_0001>

<llo_original>
// kernel: tpu_custom_call.1
$region0: #{tpu_custom_call.1}
  #allocation0 [shape = 'u32[]', space=smem, size = 0x4, offset = 0x4, fixed_abs, tag = 'smem constant byte address 0x4 - core index']
  #allocation1 [shape = 'u32[72,128]{1,0:T(1,128)}', space=vmem, size = 0x9000, scoped, tag = 'internal scratch']
  %s0 = inlined_call_operand.hbm [shape: f32[8,128], index: 0, kind: input, shape index: {}]
  %s1 = inlined_call_operand.hbm [shape: f32[128,128], index: 1, kind: input, shape index: {}]
  %s2 = inlined_call_operand.vmem [shape: f32[1,128], index: 2, kind: input, shape index: {}]
  %s3 = inlined_call_operand.vmem [shape: f32[1,128], index: 3, kind: input, shape index: {}]
  %s4 = inlined_call_operand.hbm [shape: f32[8,256], index: 4, kind: output, shape index: {}]
  %s5 = sld [smem:[#allocation0]]
  $region34: #{tpu_custom_call.1} parent=0
    _
  %s7 = ssub.s32 1, %s5
  %s8 = scalar_select 0, %s7, %s5
  $region1: #{tpu_custom_call.1} parent=0
    #allocation2 [shape = 'u8[4096]{0}', space=vmem, size = 0x1000, scoped, tag = 'input window, operand 0, single buffered']
    #allocation3 [shape = 's32[1]{0}', space=sflag, size = 0x4, scoped, tag = 'scoped memory for tpu_custom_call.1']
    #allocation4 [shape = 's32[1]{0}', space=sflag, size = 0x4, scoped, tag = 'scoped memory for tpu_custom_call.1']
    #allocation5 [shape = 'u8[65536]{0}', space=vmem, size = 0x10000, scoped, tag = 'input window, operand 1, single buffered']
    #allocation6 [shape = 's32[1]{0}', space=sflag, size = 0x4, scoped, tag = 'scoped memory for tpu_custom_call.1']
    #allocation7 [shape = 'u8[8192]{0}', space=vmem, size = 0x2000, scoped, tag = 'output window, operand 0, single buffered']
    %9 = vsyncpa [#allocation3], 0
    %10 = vsyncpa [#allocation6], 0
    %11 = vsyncpa [#allocation4], 0
    // Predicated region
    $region2: #{tpu_custom_call.1} parent=1 // pred_check
      _
    $region3: #{tpu_custom_call.1} parent=1 // pred_check_branch
      %13 = sbr.rel (0) target = $region5
    $region4: #{tpu_custom_call.1} parent=1 // pred_region
      %15 = vsyncadd [#allocation3], 0
      %s17 = sshll.u32 %s0, 4
      %s18 = int_to_ptr.hbm [resolvable:$true] %s17
      %s19 = sshll.u32 [#allocation2], 4
      %s20 = int_to_ptr.vmem [resolvable:$true] %s19
      %22 = dma.hbm_to_vmem [thread:$0]  %s18, 128, %s20, [#allocation3]
    $region5: #{tpu_custom_call.1} parent=1 // pred_fallthru
      _
    // Predicated region
    $region6: #{tpu_custom_call.1} parent=1 // pred_check
      _
    $region7: #{tpu_custom_call.1} parent=1 // pred_check_branch
      %24 = sbr.rel (0) target = $region9
    $region8: #{tpu_custom_call.1} parent=1 // pred_region
      %26 = vsyncadd [#allocation6], 0
      %s27 = sshll.u32 %s1, 4
      %s28 = int_to_ptr.hbm [resolvable:$true] %s27
      %s29 = sshll.u32 [#allocation5], 4
      %s30 = int_to_ptr.vmem [resolvable:$true] %s29
      %35 = dma.hbm_to_vmem [thread:$0]  %s28, 2048, %s30, [#allocation6], 128, 128, 8
    $region9: #{tpu_custom_call.1} parent=1 // pred_fallthru
      _
    // Predicated region
    $region10: #{tpu_custom_call.1} parent=1 // pred_check
      _
    $region11: #{tpu_custom_call.1} parent=1 // pred_check_branch
      %37 = sbr.rel (0) target = $region13
    $region12: #{tpu_custom_call.1} parent=1 // pred_region
      _
    $region13: #{tpu_custom_call.1} parent=1 // pred_fallthru
      _
    // Predicated region
    $region14: #{tpu_custom_call.1} parent=1 // pred_check
      _
    $region15: #{tpu_custom_call.1} parent=1 // pred_check_branch
      %39 = sbr.rel (0) target = $region17
    $region16: #{tpu_custom_call.1} parent=1 // pred_region
      _
    $region17: #{tpu_custom_call.1} parent=1 // pred_fallthru
      _
    // Predicated region
    $region18: #{tpu_custom_call.1} parent=1 // pred_check
      _
    $region19: #{tpu_custom_call.1} parent=1 // pred_check_branch
      %41 = sbr.rel (0) target = $region21
    $region20: #{tpu_custom_call.1} parent=1 // pred_region
      %43 = dma.done [#allocation3], 128
    $region21: #{tpu_custom_call.1} parent=1 // pred_fallthru
      _
    // Predicated region
    $region22: #{tpu_custom_call.1} parent=1 // pred_check
      _
    $region23: #{tpu_custom_call.1} parent=1 // pred_check_branch
      %45 = sbr.rel (0) target = $region25
    $region24: #{tpu_custom_call.1} parent=1 // pred_region
      %47 = dma.done [#allocation6], 2048
    $region25: #{tpu_custom_call.1} parent=1 // pred_fallthru
      _
    %v48 = vld [vmem:[#allocation2] sm:$0xff]
    %v49 = vld [vmem:[#allocation5] sm:$0xff]
    %v50 = vld [vmem:[#allocation5 + $0x8] sm:$0xff]
    %v51 = vld [vmem:[#allocation5 + $0x10] sm:$0xff]
    %v52 = vld [vmem:[#allocation5 + $0x18] sm:$0xff]
    %v53 = vld [vmem:[#allocation5 + $0x20] sm:$0xff]
    %v54 = vld [vmem:[#allocation5 + $0x28] sm:$0xff]
    %v55 = vld [vmem:[#allocation5 + $0x30] sm:$0xff]
    %v56 = vld [vmem:[#allocation5 + $0x38] sm:$0xff]
    %v57 = vld [vmem:[#allocation5 + $0x40] sm:$0xff]
    %v58 = vld [vmem:[#allocation5 + $0x48] sm:$0xff]
    %v59 = vld [vmem:[#allocation5 + $0x50] sm:$0xff]
    %v60 = vld [vmem:[#allocation5 + $0x58] sm:$0xff]
    %v61 = vld [vmem:[#allocation5 + $0x60] sm:$0xff]
    %v62 = vld [vmem:[#allocation5 + $0x68] sm:$0xff]
    %v63 = vld [vmem:[#allocation5 + $0x70] sm:$0xff]
    %v64 = vld [vmem:[#allocation5 + $0x78] sm:$0xff]
    %65 = vmatpush.xpose.msra.mxu0 %v64
    %66 = vmatpush.xpose.msra.mxu0 %v63
    %67 = vmatpush.xpose.msra.mxu0 %v62
    %68 = vmatpush.xpose.msra.mxu0 %v61
    %69 = vmatpush.xpose.msra.mxu0 %v60
    %70 = vmatpush.xpose.msra.mxu0 %v59
    %71 = vmatpush.xpose.msra.mxu0 %v58
    %72 = vmatpush.xpose.msra.mxu0 %v57
    %73 = vmatpush.xpose.msra.mxu0 %v56
    %74 = vmatpush.xpose.msra.mxu0 %v55
    %75 = vmatpush.xpose.msra.mxu0 %v54
    %76 = vmatpush.xpose.msra.mxu0 %v53
    %77 = vmatpush.xpose.msra.mxu0 %v52
    %78 = vmatpush.xpose.msra.mxu0 %v51
    %79 = vmatpush.xpose.msra.mxu0 %v50
    %80 = vmatpush.xpose.msra.mxu0 %v49
    %81 = vmatmul.f32.gmra.mxu0 %v48
    %v82 = vpop.f32.mrf.mxu0
    %v83 = vadd.f32 0.0, %v82
    %84 = vdwg.mxu0
    %v85 = vrot.slane %v83, 4
    %v86 = vadd.f32 %v83, %v85
    %v87 = vrot.slane %v86, 2
    %v88 = vadd.f32 %v86, %v87
    %v89 = vrot.slane %v88, 1
    %v90 = vadd.f32 %v88, %v89
    %v91 = vrcp.pop 8.0
    %v92 = vmul.f32 8.0, %v91
    %v93 = vsub.f32 1.0, %v92
    %v94 = vmul.f32 %v91, %v93
    %v95 = vadd.f32 %v91, %v94
    %vm96 = vweird.f32 %v91
    %v97 = vsel %vm96, %v91, %v95
    %v98 = vmul.f32 %v90, %v97
    %v99 = vsub.f32 %v83, %v98
    %v100 = vmul.f32 %v99, %v99
    %v101 = vrot.slane %v100, 4
    %v102 = vadd.f32 %v100, %v101
    %v103 = vrot.slane %v102, 2
    %v104 = vadd.f32 %v102, %v103
    %v105 = vrot.slane %v104, 1
    %v106 = vadd.f32 %v104, %v105
    %v107 = vmul.f32 %v106, %v97
    %v108 = vadd.f32 %v107, 1e-05
    %v109 = vrsqrt.pop %v108
    %v110 = vmul.f32 %v109, %v108
    %v111 = vmul.f32 %v110, %v109
    %v112 = vmul.f32 0.5, %v111
    %v113 = vsub.f32 1.5, %v112
    %v114 = vmul.f32 %v109, %v113
    %vm115 = vweird.f32 %v108
    %vm116 = vweird.f32 %v109
    %vm117 = vmor %vm115, %vm116
    %v118 = vsel %vm117, %v109, %v114
    %v119 = vmul.f32 %v99, %v118
    %v120 = vld [vmem:[%s2] sm:$0x1]
    %v122 = vperm.slane %v120, 0
    %v124 = vmul.f32 %v119, %v122
    %v125 = vld [vmem:[%s3] sm:$0x1]
    %v127 = vperm.slane %v125, 0
    %v129 = vadd.f32 %v124, %v127
    %v130 = vmax.f32 %v129, 0.0
    %131 = vst [vmem:[#allocation7] sm:$0xff] %v130
    %132 = vst [vmem:[#allocation7 + $0x8] sm:$0xff] %v48
    // Predicated region
    $region26: #{tpu_custom_call.1} parent=1 // pred_check
      _
    $region27: #{tpu_custom_call.1} parent=1 // pred_check_branch
      %134 = sbr.rel (0) target = $region29
    $region28: #{tpu_custom_call.1} parent=1 // pred_region
      %136 = vsyncadd [#allocation4], 0
      %s138 = sshll.u32 [#allocation7], 4
      %s139 = int_to_ptr.vmem [resolvable:$true] %s138
      %s140 = sshll.u32 %s4, 4
      %s141 = int_to_ptr.hbm [resolvable:$true] %s140
      %143 = dma.vmem_to_hbm [thread:$0]  %s139, 256, %s141, [#allocation4]
    $region29: #{tpu_custom_call.1} parent=1 // pred_fallthru
      _
    // Predicated region
    $region30: #{tpu_custom_call.1} parent=1 // pred_check
      _
    $region31: #{tpu_custom_call.1} parent=1 // pred_check_branch
      %145 = sbr.rel (0) target = $region33
    $region32: #{tpu_custom_call.1} parent=1 // pred_region
      %147 = dma.done [#allocation4], 256
    $region33: #{tpu_custom_call.1} parent=1 // pred_fallthru
      _
    %148 = vsyncpa [#allocation3], 1
    %149 = vsyncpa [#allocation6], 1
    %150 = vsyncpa [#allocation4], 1

</llo_original>
